<compile_context>
chip_gen: v5e
topology: v5e:2x2
jax: 0.10.0
libtpu: 0.0.40
codegen_flags: <defaults>
</compile_context>

<pallas_src>
import functools

import jax
import jax.numpy as jnp
from jax import lax
from jax.experimental import pallas as pl
from jax.experimental.pallas import tpu as pltpu


# ----------------------------------------------------------------------------
# Kernel 1: streaming gram accumulation (HBM-bandwidth bound).
# ----------------------------------------------------------------------------
def gram_kernel(feat_ref, gram_ref):
    """grid = (ncores, kt_per_core); gram_ref is this core's [1, b2, b2] slice,
    resident across the (arbitrary) reduction axis."""
    @pl.when(pl.program_id(1) == 0)
    def _():
        gram_ref[...] = jnp.zeros_like(gram_ref)

    # Contract dim-1 against dim-1: no transposed copy of the feature tile is
    # materialized (verified to avoid a per-tile vxpose of the [b2, tk] tile).
    x = feat_ref[...]                                            # [b2, tk] native dtype
    g = lax.dot_general(x, x, dimension_numbers=(((1,), (1,)), ((), ())),
                        preferred_element_type=jnp.float32)      # [b2, b2] f32
    gram_ref[...] += g[None, :, :]


# ----------------------------------------------------------------------------
# Kernel 2: finalize (runs once, tiny).
# ----------------------------------------------------------------------------
def upc_finalize_kernel(gram_ref, ranking_ref, choice_ref, out_ref, *,
                        num_class, b2):
    gram = jnp.sum(gram_ref[...], axis=0)                        # [b2, b2] f32

    # Squared norms straight off the gram diagonal; single XLU reduce, the row
    # vector is just the transpose of the column vector.
    row_i = lax.broadcasted_iota(jnp.int32, (b2, b2), 0)
    col_i = lax.broadcasted_iota(jnp.int32, (b2, b2), 1)
    diag = jnp.where(row_i == col_i, gram, 0.0)
    sq_col = jnp.sum(diag, axis=1, keepdims=True)                # [b2, 1]
    sq_row = jnp.transpose(sq_col)                               # [1, b2]

    # clamp(dist^2, 1e-12) == sqrt(clamp(dist^2, 1e-12))^2  -> sqrt folded.
    dist2 = jnp.maximum(sq_col + sq_row - 2.0 * gram, 1e-12)

    ranking = ranking_ref[...]                                   # [b2, C] int32
    labels_row = jnp.transpose(ranking[:, 0:1])                  # [1, b2]

    # Soft dictionary (nominal values of the torch.arange calls), exact
    # division — this runs once in the finalize so precision is free:
    #   dic_s[i, j] = 1 - j/choice[i]                      , j <  choice[i]
    #   dic_s[i, j] = -(j - choice[i] + 1)/(C - choice[i]) , j >= choice[i]
    c = choice_ref[...].astype(jnp.float32)                      # [b2, 1]
    j_idx = lax.broadcasted_iota(jnp.float32, (b2, num_class), 1)
    dic_s = jnp.where(j_idx < c,
                      1.0 - j_idx / c,
                      -(j_idx - c + 1.0) / (float(num_class) - c))   # [b2, C]

    # Every ranking row is a class permutation, so exactly one j matches each
    # (i, k) -> PyTorch's initial eq-mask is always overwritten (dead); start
    # from zeros and keep last-match-wins (== the PyTorch double loop).
    mask = jnp.zeros((b2, b2), jnp.float32)
    for j in range(num_class):
        match = ranking[:, j:j + 1] == labels_row                # [b2, b2]
        mask = jnp.where(match, dic_s[:, j:j + 1], mask)

    loss = jnp.sum(dist2 * mask * mask) * (1.0 / float(b2 * b2))
    out_ref[...] = loss.reshape(1, 1)


# ----------------------------------------------------------------------------
# Generation-aware planning.
# ----------------------------------------------------------------------------
def _vmem_plan(b2):
    """Returns (num_tensorcores, vmem_limit_bytes, per-buffer feature budget)."""
    kind = ""
    try:
        kind = jax.devices()[0].device_kind.lower()
    except Exception:
        pass
    if "v7" in kind:                       # 64 MiB physical VMEM per TC, 2 TCs
        ncores, vmem_limit = 2, 48 << 20
    elif "v6" in kind:                     # 128 MiB physical VMEM, 1 TC
        ncores, vmem_limit = 1, 96 << 20
    elif "v5p" in kind or "v4" in kind:    # megacore, 128 MiB VMEM per core
        ncores, vmem_limit = 2, 96 << 20
    elif "v5" in kind:                     # v5e / v5 lite: raise above its
        ncores, vmem_limit = 1, 64 << 20   # 16 MiB scoped-VMEM default
    else:                                  # unknown -> conservative
        ncores, vmem_limit = 1, 32 << 20
    usable = int(vmem_limit * 0.75)        # headroom for compiler scratch
    resident_other = 2 * b2 * b2 * 4 + (1 << 20)   # gram output block + misc
    feat_budget = max(1 << 20, (usable - resident_other) // 2)   # per buffer (x2)
    return ncores, vmem_limit, feat_budget


def _choose_tiling(d, b2, itemsize, ncores, feat_budget_bytes):
    """Pick tk (multiple of 128, fits the per-buffer budget) and the padded
    feature dim so the K tiles split evenly across the cores."""
    lane = 128
    d_ceil = pl.cdiv(d, lane) * lane
    tk_cap = max(lane, (feat_budget_bytes // max(1, b2 * itemsize)) // lane * lane)
    n_chunks = d_ceil // lane
    min_tiles = pl.cdiv(n_chunks * lane, tk_cap)
    kt_total = pl.cdiv(min_tiles, ncores) * ncores
    tk = pl.cdiv(n_chunks, kt_total) * lane
    d_pad = tk * kt_total
    return tk, d_pad, kt_total // ncores


# ----------------------------------------------------------------------------
# Wrapper.
# ----------------------------------------------------------------------------
def upc_loss(features, ranking, num_class, choice, *, stream_dtype=None,
             block_k=None):
    """features: [b2, dim, h, w], ranking: [b2, num_class] int, num_class:
    python int, choice: [b2] int. Returns scalar f32 loss.
    stream_dtype=jnp.bfloat16 halves the HBM read (kernel is mem-bound);
    accumulation stays f32 on the MXU."""
    b2 = features.shape[0]
    if b2 == 0:
        return jnp.zeros((), jnp.float32)

    feat = features.reshape(b2, -1)
    if stream_dtype is not None:
        feat = feat.astype(stream_dtype)
    d = feat.shape[1]
    ranking = ranking.astype(jnp.int32)                          # [b2, C]
    choice = jnp.asarray(choice).reshape(b2, 1).astype(jnp.int32)  # [b2, 1]

    ncores, vmem_limit, feat_budget = _vmem_plan(b2)
    itemsize = jnp.dtype(feat.dtype).itemsize

    if block_k is not None:
        assert block_k % 128 == 0, "block_k must be a multiple of 128"
        tk = block_k
        chunk = tk * ncores
        d_pad = pl.cdiv(d, chunk) * chunk
        kt_per_core = d_pad // chunk
    else:
        tk, d_pad, kt_per_core = _choose_tiling(d, b2, itemsize, ncores,
                                                feat_budget)

    # Zero-pad the feature dim: does not change X @ X^T, keeps tiling legal.
    if d_pad != d:
        feat = jnp.pad(feat, ((0, 0), (0, d_pad - d)))

    cost = pl.CostEstimate(
        flops=2 * b2 * b2 * d_pad,
        transcendentals=0,
        bytes_accessed=b2 * d_pad * itemsize + ncores * b2 * b2 * 4)

    # Kernel 1: per-core partial grams. Output block is revisited across the
    # (arbitrary) reduction axis -> it is the accumulator; each core owns its
    # own output slice along the (parallel) core axis.
    # TODO(synk): for very large b2 the [ncores, b2, b2] accumulator should be
    # tiled over (row, col) output blocks as well.
    gram_parts = pl.pallas_call(
        gram_kernel,
        out_shape=jax.ShapeDtypeStruct((ncores, b2, b2), jnp.float32),
        grid=(ncores, kt_per_core),
        in_specs=[pl.BlockSpec((b2, tk),
                               lambda c, k, kpc=kt_per_core: (0, c * kpc + k))],
        out_specs=pl.BlockSpec((1, b2, b2), lambda c, k: (c, 0, 0)),
        compiler_params=pltpu.CompilerParams(
            dimension_semantics=("parallel", "arbitrary"),
            vmem_limit_bytes=vmem_limit),
        cost_estimate=cost,
    )(feat)

    # Kernel 2: tiny finalize on the summed gram (single invocation, all VMEM).
    out = pl.pallas_call(
        functools.partial(upc_finalize_kernel, num_class=num_class, b2=b2),
        out_shape=jax.ShapeDtypeStruct((1, 1), jnp.float32),
    )(gram_parts, ranking, choice)
    return out[0, 0]


# ----------------------------------------------------------------------------
# Pure-JAX reference mirroring the PyTorch forward (f32, exact divides).
# ----------------------------------------------------------------------------
def upc_loss_ref(features, ranking, num_class, choice):
    b2 = features.shape[0]
    x = features.reshape(b2, -1).astype(jnp.float32)
    sq = jnp.sum(x * x, axis=1, keepdims=True)
    dist2 = sq + sq.T - 2.0 * (x @ x.T)
    sim = jnp.sqrt(jnp.clip(dist2, 1e-12))
    labels = ranking[:, 0]
    mask = (labels[:, None] == labels[None, :]).astype(jnp.float32)
    c = choice.astype(jnp.float32)[:, None]
    j = jnp.arange(num_class, dtype=jnp.float32)[None, :]
    dic = jnp.where(j < c, 1.0 - j / c,
                    -(j - c + 1.0) / (float(num_class) - c))
    for jj in range(num_class):
        match = ranking[:, jj][:, None] == labels[None, :]
        mask = jnp.where(match, dic[:, jj][:, None], mask)
    return jnp.mean((sim * mask) ** 2)


if __name__ == "__main__":
    key = jax.random.PRNGKey(0)

    b2, dim, h, w = 8, 4, 16, 16          # D = dim*h*w = 1024
    num_class = 4

    features = jax.random.normal(key, (b2, dim, h, w), dtype=jnp.float32)
    # each row of `ranking` is a deterministic permutation of the classes;
    # ranking[:, 0] plays the role of the unreliable pseudo label.
    ranking = jnp.stack(
        [jnp.roll(jnp.arange(num_class, dtype=jnp.int32), i % num_class)
         for i in range(b2)], axis=0)                           # [b2, C]
    choice = jnp.array([1, 2, 3, 2, 1, 3, 2, 1], dtype=jnp.int32)  # [b2]

    loss_ref = jax.block_until_ready(
        upc_loss_ref(features, ranking, num_class, choice))

    # auto tiling, forced multi-step grid (exercises init/accumulate/finalize),
    # and the bf16 streaming path (half the HBM read of this mem-bound kernel).
    loss_auto = jax.block_until_ready(
        upc_loss(features, ranking, num_class, choice))
    loss_tiled = jax.block_until_ready(
        upc_loss(features, ranking, num_class, choice, block_k=256))
    loss_bf16 = jax.block_until_ready(
        upc_loss(features, ranking, num_class, choice,
                 stream_dtype=jnp.bfloat16))

    for name, val, rtol in (("auto", loss_auto, 3e-3),
                            ("tiled", loss_tiled, 3e-3),
                            ("bf16", loss_bf16, 5e-2)):
        assert jnp.isfinite(val), f"{name}: loss is not finite"
        assert jnp.allclose(val, loss_ref, rtol=rtol, atol=1e-5), (
            f"{name} mismatch: pallas={val} ref={loss_ref}")

    print("KERNEL_OK")
</pallas_src>

<mosaic_0001>
module attributes {stable_mosaic.version = 11 : i64} {
  func.func @gram_kernel(%arg0: i32, %arg1: i32, %arg2: memref<8x1024xf32, #tpu.memory_space<vmem>>, %arg3: memref<1x8x8xf32, #tpu.memory_space<vmem>>) attributes {dimension_semantics = [#tpu.dimension_semantics<parallel>, #tpu.dimension_semantics<arbitrary>], iteration_bounds = array<i64: 1, 1>, scalar_prefetch = 0 : i64, scratch_operands = 0 : i64, tpu.core_type = #tpu.core_type<tc>, window_params = [{transform_indices = @transform_0, window_bounds = array<i64: 8, 1024>}, {transform_indices = @transform_1, window_bounds = array<i64: 1, 8, 8>}]} {
    %c0_i32 = arith.constant 0 : i32
    %0 = arith.cmpi eq, %arg1, %c0_i32 : i32
    %1 = arith.extui %0 : i1 to i32
    %c0_i32_0 = arith.constant 0 : i32
    %2 = arith.cmpi ne, %1, %c0_i32_0 : i32
    scf.if %2 {
      %cst_8 = arith.constant 0.000000e+00 : f32
      %9 = vector.broadcast %cst_8 : f32 to vector<1x8x8xf32>
      %c0_9 = arith.constant 0 : index
      %c0_10 = arith.constant 0 : index
      %c0_11 = arith.constant 0 : index
      %10 = vector.load %arg3[%c0_9, %c0_10, %c0_11] : memref<1x8x8xf32, #tpu.memory_space<vmem>>, vector<1x8x8xf32>
      tpu.vector_store %arg3[%c0_9, %c0_10, %c0_11], %9 {strides = array<i32>} : memref<1x8x8xf32, #tpu.memory_space<vmem>>, vector<1x8x8xf32>,
    } else {
    }
    %c0 = arith.constant 0 : index
    %c0_1 = arith.constant 0 : index
    %3 = vector.load %arg2[%c0, %c0_1] : memref<8x1024xf32, #tpu.memory_space<vmem>>, vector<8x1024xf32>
    %cst = arith.constant dense<0.000000e+00> : vector<8x8xf32>
    %4 = tpu.matmul %3, %3, %cst {dimension_numbers = #tpu.dot_dimension_numbers<[1], [1], [0], [0], [0, 0, 1, 0], [], []>} : vector<8x1024xf32>, vector<8x1024xf32>, vector<8x8xf32> -> vector<8x8xf32>
    %c0_2 = arith.constant 0 : index
    %c0_3 = arith.constant 0 : index
    %c0_4 = arith.constant 0 : index
    %5 = vector.load %arg3[%c0_2, %c0_3, %c0_4] : memref<1x8x8xf32, #tpu.memory_space<vmem>>, vector<1x8x8xf32>
    %6 = vector.shape_cast %4 : vector<8x8xf32> to vector<1x8x8xf32>
    %7 = arith.addf %5, %6 : vector<1x8x8xf32>
    %c0_5 = arith.constant 0 : index
    %c0_6 = arith.constant 0 : index
    %c0_7 = arith.constant 0 : index
    %8 = vector.load %arg3[%c0_5, %c0_6, %c0_7] : memref<1x8x8xf32, #tpu.memory_space<vmem>>, vector<1x8x8xf32>
    tpu.vector_store %arg3[%c0_5, %c0_6, %c0_7], %7 {strides = array<i32>} : memref<1x8x8xf32, #tpu.memory_space<vmem>>, vector<1x8x8xf32>,
    return
  }
  func.func @transform_0(%arg0: i32, %arg1: i32) -> (i32, i32) {
    %c1_i32 = arith.constant 1 : i32
    %0 = arith.muli %arg0, %c1_i32 : i32
    %1 = arith.addi %0, %arg1 : i32
    %c0_i32 = arith.constant 0 : i32
    %c0_i32_0 = arith.constant 0 : i32
    return %c0_i32, %1 : i32, i32
  }
  func.func @transform_1(%arg0: i32, %arg1: i32) -> (i32, i32, i32) {
    %c0_i32 = arith.constant 0 : i32
    %c0_i32_0 = arith.constant 0 : i32
    %c0_i32_1 = arith.constant 0 : i32
    return %arg0, %c0_i32, %c0_i32_0 : i32, i32, i32
  }
}

</mosaic_0001>

<llo_original>
// kernel: tpu_custom_call.1
$region0: #{tpu_custom_call.1}
  #allocation0 [shape = 'u32[]', space=smem, size = 0x4, offset = 0x4, fixed_abs, tag = 'smem constant byte address 0x4 - core index']
  #allocation1 [shape = 'u32[72,128]{1,0:T(1,128)}', space=vmem, size = 0x9000, scoped, tag = 'internal scratch']
  %s0 = inlined_call_operand.hbm [shape: f32[8,1024], index: 0, kind: input, shape index: {}]
  %s1 = inlined_call_operand.hbm [shape: f32[1,8,8], index: 1, kind: output, shape index: {}]
  %s2 = sld [smem:[#allocation0]]
  $region22: #{tpu_custom_call.1} parent=0
    _
  %s4 = ssub.s32 1, %s2
  %s5 = scalar_select 0, %s4, %s2
  $region1: #{tpu_custom_call.1} parent=0
    #allocation2 [shape = 'u8[32768]{0}', space=vmem, size = 0x8000, scoped, tag = 'input window, operand 0, single buffered']
    #allocation3 [shape = 's32[1]{0}', space=sflag, size = 0x4, scoped, tag = 'scoped memory for tpu_custom_call.1']
    #allocation4 [shape = 's32[1]{0}', space=sflag, size = 0x4, scoped, tag = 'scoped memory for tpu_custom_call.1']
    #allocation5 [shape = 'u8[4096]{0}', space=vmem, size = 0x1000, scoped, tag = 'output window, operand 0, single buffered']
    %6 = vsyncpa [#allocation3], 0
    %7 = vsyncpa [#allocation4], 0
    // Predicated region
    $region2: #{tpu_custom_call.1} parent=1 // pred_check
      _
    $region3: #{tpu_custom_call.1} parent=1 // pred_check_branch
      %9 = sbr.rel (0) target = $region5
    $region4: #{tpu_custom_call.1} parent=1 // pred_region
      %s10 = sadd.s32 0, 0
      %s11 = smul.u32 8, %s10
      %13 = vsyncadd [#allocation3], 0
      %s14 = smul.addr %s11, 8
      %s15 = scalar_lea.hbm %s0, %s14
      %s17 = sshll.u32 %s15, 4
      %s18 = int_to_ptr.hbm [resolvable:$true] %s17
      %s19 = sshll.u32 [#allocation2], 4
      %s20 = int_to_ptr.vmem [resolvable:$true] %s19
      %22 = dma.hbm_to_vmem [thread:$0]  %s18, 1024, %s20, [#allocation3]
    $region5: #{tpu_custom_call.1} parent=1 // pred_fallthru
      _
    // Predicated region
    $region6: #{tpu_custom_call.1} parent=1 // pred_check
      _
    $region7: #{tpu_custom_call.1} parent=1 // pred_check_branch
      %24 = sbr.rel (0) target = $region9
    $region8: #{tpu_custom_call.1} parent=1 // pred_region
      %26 = dma.done [#allocation3], 1024
    $region9: #{tpu_custom_call.1} parent=1 // pred_fallthru
      _
    %s27 = sadd.s32 0, 0
    %s28 = smul.u32 8, %s27
    %p29 = scmp.eq.s32.totalorder 0, 0
    // Predicated region
    $region10: #{tpu_custom_call.1} parent=1 // pred_check
      %p30 = pneg %p29
    $region11: #{tpu_custom_call.1} parent=1 // pred_check_branch
      %32 = sbr.rel (%p30) target = $region13
    $region12: #{tpu_custom_call.1} parent=1 // pred_region
      %vm33 = vcmask 64512
      %34 = vst.msk [vmem:[#allocation5] sm:$0xff] %vm33, 0.0
    $region13: #{tpu_custom_call.1} parent=1 // pred_fallthru
      _
    %v35 = vld [vmem:[#allocation2] sm:$0xff]
    %v36 = vld [vmem:[#allocation2 + $0x8] sm:$0xff]
    %v37 = vld [vmem:[#allocation2 + $0x10] sm:$0xff]
    %v38 = vld [vmem:[#allocation2 + $0x18] sm:$0xff]
    %v39 = vld [vmem:[#allocation2 + $0x20] sm:$0xff]
    %v40 = vld [vmem:[#allocation2 + $0x28] sm:$0xff]
    %v41 = vld [vmem:[#allocation2 + $0x30] sm:$0xff]
    %v42 = vld [vmem:[#allocation2 + $0x38] sm:$0xff]
    %43 = vmatpush.xpose.msra.mxu0 0.0
    %44 = vmatpush.xpose.msra.mxu0 0.0
    %45 = vmatpush.xpose.msra.mxu0 0.0
    %46 = vmatpush.xpose.msra.mxu0 0.0
    %47 = vmatpush.xpose.msra.mxu0 0.0
    %48 = vmatpush.xpose.msra.mxu0 0.0
    %49 = vmatpush.xpose.msra.mxu0 0.0
    %50 = vmatpush.xpose.msra.mxu0 0.0
    %51 = vmatpush.xpose.msra.mxu0 0.0
    %52 = vmatpush.xpose.msra.mxu0 0.0
    %53 = vmatpush.xpose.msra.mxu0 0.0
    %54 = vmatpush.xpose.msra.mxu0 0.0
    %55 = vmatpush.xpose.msra.mxu0 0.0
    %56 = vmatpush.xpose.msra.mxu0 0.0
    %57 = vmatpush.xpose.msra.mxu0 0.0
    %58 = vmatpush.xpose.msra.mxu0 %v35
    %59 = vmatmul.f32.gmra.mxu0 %v35
    %v60 = vpop.f32.mrf.mxu0
    %v61 = vadd.f32 0.0, %v60
    %62 = vdwg.mxu0
    %63 = vmatpush.xpose.msra.mxu0 0.0
    %64 = vmatpush.xpose.msra.mxu0 0.0
    %65 = vmatpush.xpose.msra.mxu0 0.0
    %66 = vmatpush.xpose.msra.mxu0 0.0
    %67 = vmatpush.xpose.msra.mxu0 0.0
    %68 = vmatpush.xpose.msra.mxu0 0.0
    %69 = vmatpush.xpose.msra.mxu0 0.0
    %70 = vmatpush.xpose.msra.mxu0 0.0
    %71 = vmatpush.xpose.msra.mxu0 0.0
    %72 = vmatpush.xpose.msra.mxu0 0.0
    %73 = vmatpush.xpose.msra.mxu0 0.0
    %74 = vmatpush.xpose.msra.mxu0 0.0
    %75 = vmatpush.xpose.msra.mxu0 0.0
    %76 = vmatpush.xpose.msra.mxu0 0.0
    %77 = vmatpush.xpose.msra.mxu0 0.0
    %78 = vmatpush.xpose.msra.mxu0 %v36
    %79 = vmatmul.f32.gmra.mxu0 %v36
    %v80 = vpop.f32.mrf.mxu0
    %v81 = vadd.f32 %v61, %v80
    %82 = vdwg.mxu0
    %83 = vmatpush.xpose.msra.mxu0 0.0
    %84 = vmatpush.xpose.msra.mxu0 0.0
    %85 = vmatpush.xpose.msra.mxu0 0.0
    %86 = vmatpush.xpose.msra.mxu0 0.0
    %87 = vmatpush.xpose.msra.mxu0 0.0
    %88 = vmatpush.xpose.msra.mxu0 0.0
    %89 = vmatpush.xpose.msra.mxu0 0.0
    %90 = vmatpush.xpose.msra.mxu0 0.0
    %91 = vmatpush.xpose.msra.mxu0 0.0
    %92 = vmatpush.xpose.msra.mxu0 0.0
    %93 = vmatpush.xpose.msra.mxu0 0.0
    %94 = vmatpush.xpose.msra.mxu0 0.0
    %95 = vmatpush.xpose.msra.mxu0 0.0
    %96 = vmatpush.xpose.msra.mxu0 0.0
    %97 = vmatpush.xpose.msra.mxu0 0.0
    %98 = vmatpush.xpose.msra.mxu0 %v37
    %99 = vmatmul.f32.gmra.mxu0 %v37
    %v100 = vpop.f32.mrf.mxu0
    %v101 = vadd.f32 %v81, %v100
    %102 = vdwg.mxu0
    %103 = vmatpush.xpose.msra.mxu0 0.0
    %104 = vmatpush.xpose.msra.mxu0 0.0
    %105 = vmatpush.xpose.msra.mxu0 0.0
    %106 = vmatpush.xpose.msra.mxu0 0.0
    %107 = vmatpush.xpose.msra.mxu0 0.0
    %108 = vmatpush.xpose.msra.mxu0 0.0
    %109 = vmatpush.xpose.msra.mxu0 0.0
    %110 = vmatpush.xpose.msra.mxu0 0.0
    %111 = vmatpush.xpose.msra.mxu0 0.0
    %112 = vmatpush.xpose.msra.mxu0 0.0
    %113 = vmatpush.xpose.msra.mxu0 0.0
    %114 = vmatpush.xpose.msra.mxu0 0.0
    %115 = vmatpush.xpose.msra.mxu0 0.0
    %116 = vmatpush.xpose.msra.mxu0 0.0
    %117 = vmatpush.xpose.msra.mxu0 0.0
    %118 = vmatpush.xpose.msra.mxu0 %v38
    %119 = vmatmul.f32.gmra.mxu0 %v38
    %v120 = vpop.f32.mrf.mxu0
    %v121 = vadd.f32 %v101, %v120
    %122 = vdwg.mxu0
    %123 = vmatpush.xpose.msra.mxu0 0.0
    %124 = vmatpush.xpose.msra.mxu0 0.0
    %125 = vmatpush.xpose.msra.mxu0 0.0
    %126 = vmatpush.xpose.msra.mxu0 0.0
    %127 = vmatpush.xpose.msra.mxu0 0.0
    %128 = vmatpush.xpose.msra.mxu0 0.0
    %129 = vmatpush.xpose.msra.mxu0 0.0
    %130 = vmatpush.xpose.msra.mxu0 0.0
    %131 = vmatpush.xpose.msra.mxu0 0.0
    %132 = vmatpush.xpose.msra.mxu0 0.0
    %133 = vmatpush.xpose.msra.mxu0 0.0
    %134 = vmatpush.xpose.msra.mxu0 0.0
    %135 = vmatpush.xpose.msra.mxu0 0.0
    %136 = vmatpush.xpose.msra.mxu0 0.0
    %137 = vmatpush.xpose.msra.mxu0 0.0
    %138 = vmatpush.xpose.msra.mxu0 %v39
    %139 = vmatmul.f32.gmra.mxu0 %v39
    %v140 = vpop.f32.mrf.mxu0
    %v141 = vadd.f32 %v121, %v140
    %142 = vdwg.mxu0
    %143 = vmatpush.xpose.msra.mxu0 0.0
    %144 = vmatpush.xpose.msra.mxu0 0.0
    %145 = vmatpush.xpose.msra.mxu0 0.0
    %146 = vmatpush.xpose.msra.mxu0 0.0
    %147 = vmatpush.xpose.msra.mxu0 0.0
    %148 = vmatpush.xpose.msra.mxu0 0.0
    %149 = vmatpush.xpose.msra.mxu0 0.0
    %150 = vmatpush.xpose.msra.mxu0 0.0
    %151 = vmatpush.xpose.msra.mxu0 0.0
    %152 = vmatpush.xpose.msra.mxu0 0.0
    %153 = vmatpush.xpose.msra.mxu0 0.0
    %154 = vmatpush.xpose.msra.mxu0 0.0
    %155 = vmatpush.xpose.msra.mxu0 0.0
    %156 = vmatpush.xpose.msra.mxu0 0.0
    %157 = vmatpush.xpose.msra.mxu0 0.0
    %158 = vmatpush.xpose.msra.mxu0 %v40
    %159 = vmatmul.f32.gmra.mxu0 %v40
    %v160 = vpop.f32.mrf.mxu0
    %v161 = vadd.f32 %v141, %v160
    %162 = vdwg.mxu0
    %163 = vmatpush.xpose.msra.mxu0 0.0
    %164 = vmatpush.xpose.msra.mxu0 0.0
    %165 = vmatpush.xpose.msra.mxu0 0.0
    %166 = vmatpush.xpose.msra.mxu0 0.0
    %167 = vmatpush.xpose.msra.mxu0 0.0
    %168 = vmatpush.xpose.msra.mxu0 0.0
    %169 = vmatpush.xpose.msra.mxu0 0.0
    %170 = vmatpush.xpose.msra.mxu0 0.0
    %171 = vmatpush.xpose.msra.mxu0 0.0
    %172 = vmatpush.xpose.msra.mxu0 0.0
    %173 = vmatpush.xpose.msra.mxu0 0.0
    %174 = vmatpush.xpose.msra.mxu0 0.0
    %175 = vmatpush.xpose.msra.mxu0 0.0
    %176 = vmatpush.xpose.msra.mxu0 0.0
    %177 = vmatpush.xpose.msra.mxu0 0.0
    %178 = vmatpush.xpose.msra.mxu0 %v41
    %179 = vmatmul.f32.gmra.mxu0 %v41
    %v180 = vpop.f32.mrf.mxu0
    %v181 = vadd.f32 %v161, %v180
    %182 = vdwg.mxu0
    %183 = vmatpush.xpose.msra.mxu0 0.0
    %184 = vmatpush.xpose.msra.mxu0 0.0
    %185 = vmatpush.xpose.msra.mxu0 0.0
    %186 = vmatpush.xpose.msra.mxu0 0.0
    %187 = vmatpush.xpose.msra.mxu0 0.0
    %188 = vmatpush.xpose.msra.mxu0 0.0
    %189 = vmatpush.xpose.msra.mxu0 0.0
    %190 = vmatpush.xpose.msra.mxu0 0.0
    %191 = vmatpush.xpose.msra.mxu0 0.0
    %192 = vmatpush.xpose.msra.mxu0 0.0
    %193 = vmatpush.xpose.msra.mxu0 0.0
    %194 = vmatpush.xpose.msra.mxu0 0.0
    %195 = vmatpush.xpose.msra.mxu0 0.0
    %196 = vmatpush.xpose.msra.mxu0 0.0
    %197 = vmatpush.xpose.msra.mxu0 0.0
    %198 = vmatpush.xpose.msra.mxu0 %v42
    %199 = vmatmul.f32.gmra.mxu0 %v42
    %v200 = vpop.f32.mrf.mxu0
    %v201 = vadd.f32 %v181, %v200
    %202 = vdwg.mxu0
    %v203 = vld [vmem:[#allocation5] sm:$0xff]
    %v204 = vadd.f32 %v203, %v201
    %vm205 = vcmask 64512
    %206 = vst.msk [vmem:[#allocation5] sm:$0xff] %vm205, %v204
    // Predicated region
    $region14: #{tpu_custom_call.1} parent=1 // pred_check
      _
    $region15: #{tpu_custom_call.1} parent=1 // pred_check_branch
      %208 = sbr.rel (0) target = $region17
    $region16: #{tpu_custom_call.1} parent=1 // pred_region
      %210 = vsyncadd [#allocation4], 0
      %s212 = sshll.u32 [#allocation5], 4
      %s213 = int_to_ptr.vmem [resolvable:$true] %s212
      %s214 = sshll.u32 %s1, 4
      %s215 = int_to_ptr.hbm [resolvable:$true] %s214
      %217 = dma.vmem_to_hbm [thread:$0]  %s213, 128, %s215, [#allocation4]
    $region17: #{tpu_custom_call.1} parent=1 // pred_fallthru
      _
    // Predicated region
    $region18: #{tpu_custom_call.1} parent=1 // pred_check
      _
    $region19: #{tpu_custom_call.1} parent=1 // pred_check_branch
      %219 = sbr.rel (0) target = $region21
    $region20: #{tpu_custom_call.1} parent=1 // pred_region
      %221 = dma.done [#allocation4], 128
    $region21: #{tpu_custom_call.1} parent=1 // pred_fallthru
      _
    %222 = vsyncpa [#allocation3], 1
    %223 = vsyncpa [#allocation4], 1

</llo_original>
